<compile_context>
chip_gen: v7x
topology: tpu7x:2x2x1
jax: 0.10.0
libtpu: 0.0.40
codegen_flags: <defaults>
</compile_context>

<pallas_src>
import functools

import jax
import jax.numpy as jnp
from jax.experimental import pallas as pl
from jax.experimental.pallas import tpu as pltpu


def _round_up(x, m):
    return (x + m - 1) // m * m


def linear_sigmoid_kernel(x_ref, w_ref, b_ref, o_ref):
    """One (tm, tn) output tile; K is accumulated directly in the resident o_ref."""
    k = pl.program_id(2)

    @pl.when(k == 0)
    def _init():
        # Fold the bias into the accumulator init so the finalize branch is
        # just the sigmoid and the K loop body stays a pure MXU accumulate.
        o_ref[...] = jnp.broadcast_to(b_ref[...], o_ref.shape)

    # MXU matmul: bf16 operands, f32 accumulation straight into the f32 output
    # block (its block index (i, j) does not depend on k, so it stays resident
    # in VMEM across the whole K axis — no separate scratch needed).
    o_ref[...] += jnp.dot(
        x_ref[...], w_ref[...], preferred_element_type=jnp.float32
    )

    @pl.when(k == pl.num_programs(2) - 1)
    def _finalize():
        # sigmoid(z) = 1 / (1 + exp(-z)); exp and the approximate reciprocal
        # both land on the EUP slot, keeping the epilogue off the VALU.
        # All-f32 math, so it is safe on v5e (no bf16 VPU/EUP).
        logits = o_ref[...]
        o_ref[...] = pl.reciprocal(1.0 + jnp.exp(-logits), approx=True)


@functools.partial(jax.jit, static_argnames=("tm", "tn", "tk", "extra_k_buffering"))
def model_wrapper_forward(x, w, b, *, tm=None, tn=None, tk=None,
                          extra_k_buffering=False):
    """sigmoid(x @ w + b) via a tiled, pipelined Pallas TPU kernel.

    x: [B, D] float32, w: [D, O] float32, b: [O] float32 -> [B, O] float32.
    """
    B, D = x.shape
    Dw, O = w.shape
    assert D == Dw and b.shape == (O,)

    # ---- tile selection ---------------------------------------------------
    # 128-cubed tiles leave the kernel per-grid-step / DMA-overhead bound
    # (~30% of roofline, measured on v6e); 256-wide M/N tiles fill the
    # 2x256x256 MXU on v6e/v7x and 512-deep (or full) K tiles amortize the
    # ~0.35 us per-step overhead.  Small dims use full-dim blocks so the toy
    # problem is not padded 32->512 along K.
    if tk is None:
        tk = D if D <= 1024 else 512          # full-K block when it fits
    if tn is None:
        tn = min(256, _round_up(O, 128))      # lane-dense, MXU-filling when O large
    if tm is None:
        tm = min(256, _round_up(B, 8))        # sublane-aligned

    Bp = _round_up(B, tm)
    Op = _round_up(O, tn)
    Dp = _round_up(D, tk)

    # ---- host prologue: cast first, pad only if needed ---------------------
    x_bf = x.astype(jnp.bfloat16)
    w_bf = w.astype(jnp.bfloat16)
    if (Bp, Dp) != (B, D):
        x_bf = jnp.pad(x_bf, ((0, Bp - B), (0, Dp - D)))
    if (Dp, Op) != (D, O):
        w_bf = jnp.pad(w_bf, ((0, Dp - D), (0, Op - O)))
    b_p = b.astype(jnp.float32).reshape(1, O)
    if Op != O:
        b_p = jnp.pad(b_p, ((0, 0), (0, Op - O)))

    grid = (Bp // tm, Op // tn, Dp // tk)

    if extra_k_buffering:
        # Deeper pipelining on the K-streamed inputs; only worth it if DMA time
        # is still exposed after the tile enlargement (and VMEM headroom exists).
        x_spec = pl.BlockSpec((tm, tk), lambda i, j, k: (i, k),
                              pipeline_mode=pl.Buffered(3))
        w_spec = pl.BlockSpec((tk, tn), lambda i, j, k: (k, j),
                              pipeline_mode=pl.Buffered(3))
    else:
        x_spec = pl.BlockSpec((tm, tk), lambda i, j, k: (i, k))
        w_spec = pl.BlockSpec((tk, tn), lambda i, j, k: (k, j))

    out = pl.pallas_call(
        linear_sigmoid_kernel,
        out_shape=jax.ShapeDtypeStruct((Bp, Op), jnp.float32),
        grid_spec=pltpu.PrefetchScalarGridSpec(
            num_scalar_prefetch=0,
            grid=grid,
            in_specs=[
                x_spec,                                         # x tile (tm, tk)
                w_spec,                                         # w tile (tk, tn)
                pl.BlockSpec((1, tn), lambda i, j, k: (0, j)),  # bias per-N tile
            ],
            out_specs=pl.BlockSpec((tm, tn), lambda i, j, k: (i, j)),
        ),
        compiler_params=pltpu.CompilerParams(
            dimension_semantics=("parallel", "parallel", "arbitrary"),
            # Portable scoped-VMEM budget: default tiles need < 2 MiB
            # double-buffered, and 32 MiB stays within v7x's 64 MiB physical
            # VMEM while matching the v5e/v6e defaults.
            vmem_limit_bytes=32 * 1024 * 1024,
        ),
    )(x_bf, w_bf, b_p)

    return out[:B, :O]


if __name__ == "__main__":
    # ---- toy shape consistent with a small classifier head ----------------
    B, D, O = 8, 32, 8
    key = jax.random.PRNGKey(0)
    kx, kw, kb = jax.random.split(key, 3)
    x = jax.random.normal(kx, (B, D), dtype=jnp.float32)
    w = jax.random.normal(kw, (D, O), dtype=jnp.float32) * 0.1
    b = jax.random.normal(kb, (O,), dtype=jnp.float32) * 0.1

    probs = jax.block_until_ready(model_wrapper_forward(x, w, b))

    # Reference with the same bf16 operand rounding (f32 accumulation).
    x_bf = x.astype(jnp.bfloat16).astype(jnp.float32)
    w_bf = w.astype(jnp.bfloat16).astype(jnp.float32)
    ref_bf = jax.nn.sigmoid(x_bf @ w_bf + b[None, :])
    ref_f32 = jax.nn.sigmoid(x @ w + b[None, :])

    assert probs.shape == (B, O)
    assert jnp.allclose(probs, ref_bf, atol=1e-2, rtol=1e-2)
    assert jnp.allclose(probs, ref_f32, atol=3e-2, rtol=3e-2)

    # ---- multi-tile path: exercises K accumulation into the output block ----
    B2, D2, O2 = 384, 1024, 384
    kx2, kw2, kb2 = jax.random.split(jax.random.PRNGKey(1), 3)
    x2 = jax.random.normal(kx2, (B2, D2), dtype=jnp.float32)
    w2 = jax.random.normal(kw2, (D2, O2), dtype=jnp.float32) * 0.03
    b2 = jax.random.normal(kb2, (O2,), dtype=jnp.float32) * 0.1

    probs2 = jax.block_until_ready(model_wrapper_forward(x2, w2, b2, tk=512))
    ref2 = jax.nn.sigmoid(
        x2.astype(jnp.bfloat16).astype(jnp.float32)
        @ w2.astype(jnp.bfloat16).astype(jnp.float32)
        + b2[None, :]
    )
    assert probs2.shape == (B2, O2)
    assert jnp.allclose(probs2, ref2, atol=1e-2, rtol=1e-2)

    print("KERNEL_OK")
</pallas_src>

<mosaic_0001>
module attributes {stable_mosaic.version = 11 : i64} {
  func.func @linear_sigmoid_kernel(%arg0: i32, %arg1: i32, %arg2: i32, %arg3: memref<8x32xbf16, #tpu.memory_space<vmem>>, %arg4: memref<32x128xbf16, #tpu.memory_space<vmem>>, %arg5: memref<1x128xf32, #tpu.memory_space<vmem>>, %arg6: memref<8x128xf32, #tpu.memory_space<vmem>>) attributes {dimension_semantics = [#tpu.dimension_semantics<parallel>, #tpu.dimension_semantics<parallel>, #tpu.dimension_semantics<arbitrary>], iteration_bounds = array<i64: 1, 1, 1>, scalar_prefetch = 0 : i64, scratch_operands = 0 : i64, tpu.core_type = #tpu.core_type<tc>, window_params = [{transform_indices = @transform_0, window_bounds = array<i64: 8, 32>}, {transform_indices = @transform_1, window_bounds = array<i64: 32, 128>}, {transform_indices = @transform_2, window_bounds = array<i64: 1, 128>}, {transform_indices = @transform_3, window_bounds = array<i64: 8, 128>}]} {
    %c0_i32 = arith.constant 0 : i32
    %0 = arith.cmpi eq, %arg2, %c0_i32 : i32
    %1 = arith.extui %0 : i1 to i32
    %c0_i32_0 = arith.constant 0 : i32
    %2 = arith.cmpi ne, %1, %c0_i32_0 : i32
    scf.if %2 {
      %c0_10 = arith.constant 0 : index
      %c0_11 = arith.constant 0 : index
      %12 = vector.load %arg5[%c0_10, %c0_11] : memref<1x128xf32, #tpu.memory_space<vmem>>, vector<1x128xf32>
      %13 = vector.shape_cast %12 : vector<1x128xf32> to vector<1x128xf32>
      %14 = vector.broadcast %13 : vector<1x128xf32> to vector<8x128xf32>
      %c0_12 = arith.constant 0 : index
      %c0_13 = arith.constant 0 : index
      %15 = vector.load %arg6[%c0_12, %c0_13] : memref<8x128xf32, #tpu.memory_space<vmem>>, vector<8x128xf32>
      tpu.vector_store %arg6[%c0_12, %c0_13], %14 {strides = array<i32>} : memref<8x128xf32, #tpu.memory_space<vmem>>, vector<8x128xf32>,
    } else {
    }
    %c0 = arith.constant 0 : index
    %c0_1 = arith.constant 0 : index
    %3 = vector.load %arg6[%c0, %c0_1] : memref<8x128xf32, #tpu.memory_space<vmem>>, vector<8x128xf32>
    %c0_2 = arith.constant 0 : index
    %c0_3 = arith.constant 0 : index
    %4 = vector.load %arg3[%c0_2, %c0_3] : memref<8x32xbf16, #tpu.memory_space<vmem>>, vector<8x32xbf16>
    %c0_4 = arith.constant 0 : index
    %c0_5 = arith.constant 0 : index
    %5 = vector.load %arg4[%c0_4, %c0_5] : memref<32x128xbf16, #tpu.memory_space<vmem>>, vector<32x128xbf16>
    %cst = arith.constant dense<0.000000e+00> : vector<8x128xf32>
    %6 = tpu.matmul %4, %5, %cst {dimension_numbers = #tpu.dot_dimension_numbers<[1], [0], [0], [1], [0, 0, 1, 1], [], []>} : vector<8x32xbf16>, vector<32x128xbf16>, vector<8x128xf32> -> vector<8x128xf32>
    %7 = arith.addf %3, %6 : vector<8x128xf32>
    %c0_6 = arith.constant 0 : index
    %c0_7 = arith.constant 0 : index
    %8 = vector.load %arg6[%c0_6, %c0_7] : memref<8x128xf32, #tpu.memory_space<vmem>>, vector<8x128xf32>
    tpu.vector_store %arg6[%c0_6, %c0_7], %7 {strides = array<i32>} : memref<8x128xf32, #tpu.memory_space<vmem>>, vector<8x128xf32>,
    %c0_i32_8 = arith.constant 0 : i32
    %9 = arith.cmpi eq, %arg2, %c0_i32_8 : i32
    %10 = arith.extui %9 : i1 to i32
    %c0_i32_9 = arith.constant 0 : i32
    %11 = arith.cmpi ne, %10, %c0_i32_9 : i32
    scf.if %11 {
      %c0_10 = arith.constant 0 : index
      %c0_11 = arith.constant 0 : index
      %12 = vector.load %arg6[%c0_10, %c0_11] : memref<8x128xf32, #tpu.memory_space<vmem>>, vector<8x128xf32>
      %cst_12 = arith.constant 0.000000e+00 : f32
      %13 = vector.broadcast %cst_12 : f32 to vector<8x128xf32>
      %14 = arith.subf %13, %12 : vector<8x128xf32>
      %15 = math.exp %14 : vector<8x128xf32>
      %cst_13 = arith.constant 1.000000e+00 : f32
      %16 = vector.broadcast %cst_13 : f32 to vector<8x128xf32>
      %17 = arith.addf %16, %15 : vector<8x128xf32>
      %18 = tpu.reciprocal %17 {approx = true} : vector<8x128xf32> -> vector<8x128xf32>
      %c0_14 = arith.constant 0 : index
      %c0_15 = arith.constant 0 : index
      %19 = vector.load %arg6[%c0_14, %c0_15] : memref<8x128xf32, #tpu.memory_space<vmem>>, vector<8x128xf32>
      tpu.vector_store %arg6[%c0_14, %c0_15], %18 {strides = array<i32>} : memref<8x128xf32, #tpu.memory_space<vmem>>, vector<8x128xf32>,
    } else {
    }
    return
  }
  func.func @transform_0(%arg0: i32, %arg1: i32, %arg2: i32) -> (i32, i32) {
    %c0_i32 = arith.constant 0 : i32
    return %arg0, %arg2 : i32, i32
  }
  func.func @transform_1(%arg0: i32, %arg1: i32, %arg2: i32) -> (i32, i32) {
    %c0_i32 = arith.constant 0 : i32
    return %arg2, %arg1 : i32, i32
  }
  func.func @transform_2(%arg0: i32, %arg1: i32, %arg2: i32) -> (i32, i32) {
    %c0_i32 = arith.constant 0 : i32
    %c0_i32_0 = arith.constant 0 : i32
    return %c0_i32, %arg1 : i32, i32
  }
  func.func @transform_3(%arg0: i32, %arg1: i32, %arg2: i32) -> (i32, i32) {
    %c0_i32 = arith.constant 0 : i32
    return %arg0, %arg1 : i32, i32
  }
}

</mosaic_0001>

<llo_original>
// kernel: model_wrapper_forward.1
$region0: #{model_wrapper_forward.1}
  #allocation0 [shape = 'u32[]', space=smem, size = 0x4, offset = 0x4, fixed_abs, tag = 'smem constant byte address 0x4 - core index']
  #allocation1 [shape = 'u32[144,128]{1,0:T(1,128)}', space=vmem, size = 0x12000, scoped, tag = 'internal scratch']
  %s0 = inlined_call_operand.vmem [shape: bf16[8,32], index: 0, kind: input, shape index: {}]
  %s1 = inlined_call_operand.vmem [shape: bf16[32,128], index: 1, kind: input, shape index: {}]
  %s2 = inlined_call_operand.vmem [shape: f32[1,128], index: 2, kind: input, shape index: {}]
  %s3 = inlined_call_operand.hbm [shape: f32[8,128], index: 3, kind: output, shape index: {}]
  %s4 = sld [smem:[#allocation0]]
  $region30: #{model_wrapper_forward.1} parent=0
    _
  %s6 = ssub.s32 1, %s4
  %s7 = scalar_select 0, %s6, %s4
  $region1: #{model_wrapper_forward.1} parent=0
    #allocation2 [shape = 'u8[4096]{0}', space=vmem, size = 0x1000, scoped, tag = 'output window, operand 0, single buffered']
    #allocation3 [shape = 's32[1]{0}', space=sflag, size = 0x4, scoped, tag = 'scoped memory for model_wrapper_forward.1']
    %8 = vsyncpa [#allocation3], 0
    // Predicated region
    $region2: #{model_wrapper_forward.1} parent=1 // pred_check
      _
    $region3: #{model_wrapper_forward.1} parent=1 // pred_check_branch
      %10 = sbr.rel (0) target = $region5
    $region4: #{model_wrapper_forward.1} parent=1 // pred_region
      _
    $region5: #{model_wrapper_forward.1} parent=1 // pred_fallthru
      _
    // Predicated region
    $region6: #{model_wrapper_forward.1} parent=1 // pred_check
      _
    $region7: #{model_wrapper_forward.1} parent=1 // pred_check_branch
      %12 = sbr.rel (0) target = $region9
    $region8: #{model_wrapper_forward.1} parent=1 // pred_region
      _
    $region9: #{model_wrapper_forward.1} parent=1 // pred_fallthru
      _
    // Predicated region
    $region10: #{model_wrapper_forward.1} parent=1 // pred_check
      _
    $region11: #{model_wrapper_forward.1} parent=1 // pred_check_branch
      %14 = sbr.rel (0) target = $region13
    $region12: #{model_wrapper_forward.1} parent=1 // pred_region
      _
    $region13: #{model_wrapper_forward.1} parent=1 // pred_fallthru
      _
    %p16 = scmp.eq.s32.totalorder 0, 0
    // Predicated region
    $region14: #{model_wrapper_forward.1} parent=1 // pred_check
      %p17 = pneg %p16
    $region15: #{model_wrapper_forward.1} parent=1 // pred_check_branch
      %19 = sbr.rel (%p17) target = $region17
    $region16: #{model_wrapper_forward.1} parent=1 // pred_region
      %v20 = vld [vmem:[%s2] sm:$0x1]
      %v22 = vlaneseq
      %v23 = vshrl.u32 %v22, 7
      %v24 = vsub.s32 0, %v23
      %v25 = vrot.slane %v20, %v24
      %27 = vst [vmem:[#allocation2] sm:$0xff] %v25
    $region17: #{model_wrapper_forward.1} parent=1 // pred_fallthru
      _
    %v28 = vld [vmem:[#allocation2] sm:$0xff]
    %v29 = vld [vmem:[%s0] sm:$0xf]
    %v30 = vld [vmem:[%s1] sm:$0xf]
    %v31 = vld [vmem:[%s1 + $0x4] sm:$0xf]
    %v32 = vld [vmem:[%s1 + $0x8] sm:$0xf]
    %v33 = vld [vmem:[%s1 + $0xc] sm:$0xf]
    %v38 = vunpack.c.l.b16 %v30
    %v39 = vunpack.c.l.b16 %v31
    %v40 = vunpack.c.l.b16 %v32
    %v41 = vunpack.c.l.b16 %v33
    %v42 = vpack.c.b16 %v39, %v38
    %v43 = vpack.c.b16 %v41, %v40
    %vm46 = vcmask 261120
    %v48 = vsel %vm46, %v29, 0
    %50 = vmatprep.subr.bf16.mxu0 0
    %51 = vmatpush1.bf16.msra.mxu0 %v42
    %52 = vmatprep.subr.bf16.mxu0 0
    %53 = vmatpush1.bf16.msra.mxu0 %v43
    %54 = vmatprep.subr.bf16.mxu0 0
    %55 = vmatpush1.bf16.msra.mxu0 0
    %56 = vmatprep.subr.bf16.mxu0 0
    %57 = vmatpush1.bf16.msra.mxu0 0
    %58 = vmatprep.subr.bf16.mxu0 0
    %59 = vmatpush1.bf16.msra.mxu0 0
    %60 = vmatprep.subr.bf16.mxu0 0
    %61 = vmatpush1.bf16.msra.mxu0 0
    %62 = vmatprep.subr.bf16.mxu0 0
    %63 = vmatpush1.bf16.msra.mxu0 0
    %64 = vmatprep.subr.bf16.mxu0 0
    %65 = vmatpush1.bf16.msra.mxu0 0
    %66 = vmatprep.subr.bf16.mxu0 0
    %67 = vmatpush1.bf16.msra.mxu0 0
    %68 = vmatprep.subr.bf16.mxu0 0
    %69 = vmatpush1.bf16.msra.mxu0 0
    %70 = vmatprep.subr.bf16.mxu0 0
    %71 = vmatpush1.bf16.msra.mxu0 0
    %72 = vmatprep.subr.bf16.mxu0 0
    %73 = vmatpush1.bf16.msra.mxu0 0
    %74 = vmatprep.subr.bf16.mxu0 0
    %75 = vmatpush1.bf16.msra.mxu0 0
    %76 = vmatprep.subr.bf16.mxu0 0
    %77 = vmatpush1.bf16.msra.mxu0 0
    %78 = vmatprep.subr.bf16.mxu0 0
    %79 = vmatpush1.bf16.msra.mxu0 0
    %80 = vmatprep.subr.bf16.mxu0 0
    %81 = vmatpush1.bf16.msra.mxu0 0
    %82 = vmatprep.mubr.bf16.mxu0 0
    %83 = vmatmul.mubr.bf16.gmra.mrb[0].mxu0 %v48
    %v84 = vpop.f32.mrb[0].mxu0
    %v85 = vadd.f32 0.0, %v84
    %v86 = vpop.f32.mrb[0].mxu0
    %v87 = vpop.f32.mrb[0].mxu0
    %v88 = vpop.f32.mrb[0].mxu0
    %89 = vdwg.mxu0
    %v90 = vadd.f32 %v28, %v85
    %91 = vst [vmem:[#allocation2] sm:$0xff] %v90
    // Predicated region
    $region18: #{model_wrapper_forward.1} parent=1 // pred_check
      %p92 = pneg %p16
    $region19: #{model_wrapper_forward.1} parent=1 // pred_check_branch
      %94 = sbr.rel (%p92) target = $region21
    $region20: #{model_wrapper_forward.1} parent=1 // pred_region
      %v95 = vld [vmem:[#allocation2] sm:$0xff]
      %v96 = vsub.f32 0.0, %v95
      %v97 = vmul.f32 %v96, 1.442695
      %v98 = vpow.pop %v97
      %v99 = vadd.f32 %v98, 1.0
      %v100 = vrcp.pop %v99
      %101 = vst [vmem:[#allocation2] sm:$0xff] %v100
    $region21: #{model_wrapper_forward.1} parent=1 // pred_fallthru
      _
    // Predicated region
    $region22: #{model_wrapper_forward.1} parent=1 // pred_check
      _
    $region23: #{model_wrapper_forward.1} parent=1 // pred_check_branch
      %103 = sbr.rel (0) target = $region25
    $region24: #{model_wrapper_forward.1} parent=1 // pred_region
      %s105 = ssub.s32 128, 128
      %106 = vsyncadd [#allocation3], %s105
      %s108 = sshll.u32 [#allocation2], 4
      %s109 = int_to_ptr.vmem [resolvable:$true] %s108
      %111 = dma.vmem_to_hbm [thread:$0]  %s109, 128, %s3, [#allocation3]
    $region25: #{model_wrapper_forward.1} parent=1 // pred_fallthru
      _
    // Predicated region
    $region26: #{model_wrapper_forward.1} parent=1 // pred_check
      _
    $region27: #{model_wrapper_forward.1} parent=1 // pred_check_branch
      %113 = sbr.rel (0) target = $region29
    $region28: #{model_wrapper_forward.1} parent=1 // pred_region
      %114 = dma.done [#allocation3], 128
    $region29: #{model_wrapper_forward.1} parent=1 // pred_fallthru
      _
    %115 = vsyncpa [#allocation3], 1

</llo_original>
